<compile_context>
chip_gen: v5e
topology: v5e:2x2
jax: 0.10.0
libtpu: 0.0.40
codegen_flags: <defaults>
</compile_context>

<pallas_src>
import math

import jax
import jax.numpy as jnp
from jax.experimental import pallas as pl
from jax.experimental.pallas import tpu as pltpu

SIGMA_DATA = 1.0
EMBED_DIM = 256
HALF = EMBED_DIM // 2
_TWO_PI = 2.0 * math.pi


def _upsample_kernel(sigma_ref, low_ref, colrep_ref, up_ref):
    """One (batch, row-block): nearest-2x upsample * c_in, emitted as lane-dense group rows."""
    b = pl.program_id(0)
    sig = sigma_ref[b]                                           # f32 scalar from SMEM
    lin = low_ref.shape[-1]
    # c_in = 1 / sqrt(sigma^2 + sigma_data^2) on a single vreg row (EUP, effectively free).
    sig_row = jnp.full((1, lin), sig, dtype=jnp.float32)
    c_in = jax.lax.rsqrt(sig_row * sig_row + SIGMA_DATA * SIGMA_DATA)

    x = low_ref[...].astype(jnp.float32) * c_in                  # (r_blk, g*W), scaled pre-dup
    # Single replication matmul: each grouped input row (g source rows of W pixels) expands to
    # its 2g nearest-upsampled rows of 2W pixels, laid out as one lane-dense 4*g*W row.
    # (0/1 matrix in f32 -> MXU multi-pass is exact.)
    y = jnp.dot(x, colrep_ref[...], preferred_element_type=jnp.float32)
    up_ref[...] = y.astype(up_ref.dtype)                         # one lane-dense store


def _mapping_kernel(sig_ref, w_ref, pooler_ref, map_ref):
    """mapping_cond = [cos(f), sin(f), pooler], f = 2*pi*log1p(sigma)*w (all B rows at once)."""
    sig = sig_ref[...]                                           # (B, 1) f32
    u = 1.0 + sig
    log1p_sig = jnp.log(u) - ((u - 1.0) - sig) / u               # compensated log1p
    f = (_TWO_PI * log1p_sig) * w_ref[...]                       # (B, 1)*(1, HALF) -> (B, HALF)
    map_ref[:, :HALF] = jnp.cos(f)
    map_ref[:, HALF:EMBED_DIM] = jnp.sin(f)
    map_ref[:, EMBED_DIM:] = pooler_ref[...].astype(jnp.float32)


def _pick_group(H, W):
    """Smallest g | H such that the output group-row length 4*g*W is a multiple of 128."""
    for g in range(1, H + 1):
        if H % g == 0 and (4 * g * W) % 128 == 0:
            return g
    return 1                                                     # fallback: masked stores


def _build_colrep(W, g):
    """0/1 matrix (g*W, 4*g*W): colrep[j, m] = 1 iff grouped-input element j feeds output m."""
    lin, lout = g * W, 4 * g * W
    m = jax.lax.broadcasted_iota(jnp.int32, (lin, lout), 1)
    j = jax.lax.broadcasted_iota(jnp.int32, (lin, lout), 0)
    src = ((m // (2 * W)) // 2) * W + (m % (2 * W)) // 2
    return (j == src).astype(jnp.float32)


def noise_level_and_text_conditioned_upscaler(inputs, sigma, low_res, low_res_sigma, c,
                                              fourier_weight):
    cross_cond, cross_cond_padding, pooler = c
    B, C, H, W = low_res.shape
    P = pooler.shape[1]
    out_dtype = low_res.dtype

    g = _pick_group(H, W)
    Lin, Lout = g * W, 4 * g * W
    Ntot = C * (H // g)                                          # grouped rows per batch elem
    colrep = _build_colrep(W, g)                                 # resident; bf16 also exact if
                                                                 # VMEM-pressed at very large W
    # ---- generation-aware row-block sizing (double-buffered in+out, f32) --------------------
    try:
        vmem_cap = int(pltpu.get_tpu_info().vmem_capacity_bytes)
    except Exception:
        vmem_cap = 64 << 20                                      # conservative (v7x per-core)
    colrep_bytes = Lin * Lout * 4
    budget = min(vmem_cap // 2, 48 << 20) - 2 * colrep_bytes - (1 << 20)
    budget = max(budget, 1 << 20)
    per_row_bytes = 2 * (Lin + Lout) * 4                         # double-buffered in + out
    r_blk = min(Ntot, max(8, budget // per_row_bytes))
    if r_blk < Ntot:
        r_blk = max(8, (r_blk // 8) * 8)                         # second-minor dim: mult of 8
    n_rblocks = pl.cdiv(Ntot, r_blk)                             # partial last block is fine
    needed = r_blk * per_row_bytes + 2 * colrep_bytes + (2 << 20)
    vmem_limit = int(min(vmem_cap, max(needed, 32 << 20)))

    low2d = low_res.reshape(B, Ntot, Lin)                        # free row-major regroup

    up2d = pl.pallas_call(
        _upsample_kernel,
        out_shape=jax.ShapeDtypeStruct((B, Ntot, Lout), out_dtype),
        grid=(B, n_rblocks),
        in_specs=[
            pl.BlockSpec(memory_space=pltpu.MemorySpace.SMEM),             # low_res_sigma (B,)
            pl.BlockSpec((None, r_blk, Lin), lambda b, r: (b, r, 0)),      # grouped low_res
            pl.BlockSpec((Lin, Lout), lambda b, r: (0, 0)),                # colrep (resident)
        ],
        out_specs=pl.BlockSpec((None, r_blk, Lout), lambda b, r: (b, r, 0)),
        compiler_params=pltpu.CompilerParams(
            dimension_semantics=("parallel", "parallel"),
            vmem_limit_bytes=vmem_limit),
    )(low_res_sigma.astype(jnp.float32), low2d, colrep)

    low_res_in = up2d.reshape(B, C, 2 * H, 2 * W)                # free row-major regroup

    # Tiny O(B*(256+P)) kernel kept separate so the big kernel's grid is fully parallel.
    mapping_cond = pl.pallas_call(
        _mapping_kernel,
        out_shape=jax.ShapeDtypeStruct((B, EMBED_DIM + P), jnp.float32),
    )(low_res_sigma.astype(jnp.float32).reshape(B, 1),
      fourier_weight.astype(jnp.float32).reshape(1, HALF),       # weight.T (in_features == 1)
      pooler.astype(jnp.float32))

    # TODO(synk): inner_model is an injected submodule (a full U-Net) — not implementable here;
    # return the exact tensors this module computes and would pass to it.
    return {
        "inputs": inputs,
        "sigma": sigma,
        "unet_cond": low_res_in,
        "mapping_cond": mapping_cond,
        "cross_cond": cross_cond,
        "cross_cond_padding": cross_cond_padding,
    }


if __name__ == "__main__":
    key = jax.random.PRNGKey(0)
    ks = jax.random.split(key, 7)
    B, C, H, W = 2, 4, 16, 16
    SEQ, XDIM, PDIM = 8, 64, 128

    inputs = jax.random.normal(ks[0], (B, C, 2 * H, 2 * W), jnp.float32)
    sigma = jax.random.uniform(ks[1], (B,), jnp.float32, 0.5, 2.0)
    low_res = jax.random.normal(ks[2], (B, C, H, W), jnp.float32)
    low_res_sigma = jax.random.uniform(ks[3], (B,), jnp.float32, 0.05, 1.0)
    cross_cond = jax.random.normal(ks[4], (B, SEQ, XDIM), jnp.float32)
    cross_cond_padding = jnp.zeros((B, SEQ), jnp.float32)
    pooler = jax.random.normal(ks[5], (B, PDIM), jnp.float32)
    # FourierFeatures(1, 256, std=2): buffer of shape (embed_dim // 2, in_features) = (128, 1)
    fourier_weight = jax.random.normal(ks[6], (HALF, 1), jnp.float32) * 2.0

    out = noise_level_and_text_conditioned_upscaler(
        inputs, sigma, low_res, low_res_sigma,
        (cross_cond, cross_cond_padding, pooler), fourier_weight)
    out = jax.block_until_ready(out)

    # Pure-JAX reference check (same semantics as the PyTorch forward).
    c_in_ref = (1.0 / jnp.sqrt(low_res_sigma ** 2 + SIGMA_DATA ** 2))[:, None, None, None]
    up_expected = jnp.repeat(jnp.repeat(low_res, 2, axis=2), 2, axis=3) * c_in_ref
    f_ref = _TWO_PI * jnp.log1p(low_res_sigma)[:, None] * fourier_weight[:, 0][None, :]
    map_expected = jnp.concatenate([jnp.cos(f_ref), jnp.sin(f_ref), pooler], axis=1)

    assert out["unet_cond"].shape == (B, C, 2 * H, 2 * W)
    assert out["mapping_cond"].shape == (B, EMBED_DIM + PDIM)
    assert jnp.allclose(out["unet_cond"], up_expected, atol=1e-4, rtol=1e-4)
    assert jnp.allclose(out["mapping_cond"], map_expected, atol=1e-3, rtol=1e-3)
    print("KERNEL_OK")
</pallas_src>

<mosaic_0001>
module attributes {stable_mosaic.version = 11 : i64} {
  func.func @_upsample_kernel(%arg0: i32, %arg1: i32, %arg2: memref<2xf32, #tpu.memory_space<smem>>, %arg3: memref<1x32x32xf32, #tpu.memory_space<vmem>>, %arg4: memref<32x128xf32, #tpu.memory_space<vmem>>, %arg5: memref<1x32x128xf32, #tpu.memory_space<vmem>>) attributes {dimension_semantics = [#tpu.dimension_semantics<parallel>, #tpu.dimension_semantics<parallel>], iteration_bounds = array<i64: 2, 1>, scalar_prefetch = 0 : i64, scratch_operands = 0 : i64, tpu.core_type = #tpu.core_type<tc>, window_params = [{transform_indices = @transform_0, window_bounds = array<i64: 2>}, {transform_indices = @transform_1, window_bounds = array<i64: 1, 32, 32>}, {pipeline_mode = #tpu.pipeline_mode<synchronous>, transform_indices = @transform_2, window_bounds = array<i64: 32, 128>}, {transform_indices = @transform_3, window_bounds = array<i64: 1, 32, 128>}]} {
    %0 = arith.index_cast %arg0 : i32 to index
    %1 = memref.load %arg2[%0] : memref<2xf32, #tpu.memory_space<smem>>
    %2 = vector.broadcast %1 : f32 to vector<1x32xf32>
    %3 = arith.mulf %2, %2 : vector<1x32xf32>
    %cst = arith.constant 1.000000e+00 : f32
    %4 = vector.broadcast %cst : f32 to vector<1x32xf32>
    %5 = arith.addf %3, %4 : vector<1x32xf32>
    %6 = math.rsqrt %5 : vector<1x32xf32>
    %c0 = arith.constant 0 : index
    %c0_0 = arith.constant 0 : index
    %c0_1 = arith.constant 0 : index
    %7 = vector.load %arg3[%c0, %c0_0, %c0_1] : memref<1x32x32xf32, #tpu.memory_space<vmem>>, vector<1x32x32xf32>
    %8 = vector.shape_cast %7 : vector<1x32x32xf32> to vector<32x32xf32>
    %9 = vector.broadcast %6 : vector<1x32xf32> to vector<32x32xf32>
    %10 = arith.mulf %8, %9 : vector<32x32xf32>
    %c0_2 = arith.constant 0 : index
    %c0_3 = arith.constant 0 : index
    %11 = vector.load %arg4[%c0_2, %c0_3] : memref<32x128xf32, #tpu.memory_space<vmem>>, vector<32x128xf32>
    %cst_4 = arith.constant dense<0.000000e+00> : vector<32x128xf32>
    %12 = tpu.matmul %10, %11, %cst_4 {dimension_numbers = #tpu.dot_dimension_numbers<[1], [0], [0], [1], [0, 0, 1, 1], [], []>} : vector<32x32xf32>, vector<32x128xf32>, vector<32x128xf32> -> vector<32x128xf32>
    %c0_5 = arith.constant 0 : index
    %c0_6 = arith.constant 0 : index
    %c0_7 = arith.constant 0 : index
    %13 = vector.load %arg5[%c0_5, %c0_6, %c0_7] : memref<1x32x128xf32, #tpu.memory_space<vmem>>, vector<1x32x128xf32>
    %14 = vector.shape_cast %13 : vector<1x32x128xf32> to vector<32x128xf32>
    %15 = vector.shape_cast %12 : vector<32x128xf32> to vector<1x32x128xf32>
    tpu.vector_store %arg5[%c0_5, %c0_6, %c0_7], %15 {strides = array<i32>} : memref<1x32x128xf32, #tpu.memory_space<vmem>>, vector<1x32x128xf32>,
    return
  }
  func.func @transform_0(%arg0: i32, %arg1: i32) -> i32 {
    %c0_i32 = arith.constant 0 : i32
    %c0_i32_0 = arith.constant 0 : i32
    return %c0_i32 : i32
  }
  func.func @transform_1(%arg0: i32, %arg1: i32) -> (i32, i32, i32) {
    %c0_i32 = arith.constant 0 : i32
    %c0_i32_0 = arith.constant 0 : i32
    return %arg0, %arg1, %c0_i32 : i32, i32, i32
  }
  func.func @transform_2(%arg0: i32, %arg1: i32) -> (i32, i32) {
    %c0_i32 = arith.constant 0 : i32
    %c0_i32_0 = arith.constant 0 : i32
    %c0_i32_1 = arith.constant 0 : i32
    return %c0_i32, %c0_i32_0 : i32, i32
  }
  func.func @transform_3(%arg0: i32, %arg1: i32) -> (i32, i32, i32) {
    %c0_i32 = arith.constant 0 : i32
    %c0_i32_0 = arith.constant 0 : i32
    return %arg0, %arg1, %c0_i32 : i32, i32, i32
  }
}

</mosaic_0001>

<llo_original>
// kernel: tpu_custom_call.1
$region0: #{tpu_custom_call.1}
  #allocation0 [shape = 'u32[]', space=smem, size = 0x4, offset = 0x4, fixed_abs, tag = 'smem constant byte address 0x4 - core index']
  #allocation1 [shape = 'u32[72,128]{1,0:T(1,128)}', space=vmem, size = 0x9000, scoped, tag = 'internal scratch']
  %s0 = inlined_call_operand.hbm [shape: f32[2], index: 0, kind: input, shape index: {}]
  %s1 = inlined_call_operand.hbm [shape: f32[2,32,32], index: 1, kind: input, shape index: {}]
  %s2 = inlined_call_operand.hbm [shape: f32[32,128], index: 2, kind: input, shape index: {}]
  %s3 = inlined_call_operand.hbm [shape: f32[2,32,128], index: 3, kind: output, shape index: {}]
  %s4 = sld [smem:[#allocation0]]
  $region57: #{tpu_custom_call.1} parent=0
    _
  %s6 = ssub.s32 1, %s4
  %s7 = scalar_select 0, %s6, %s4
  $region1: #{tpu_custom_call.1} parent=0
    #allocation2 [shape = 'u8[512]{0}', space=smem, size = 0x200, scoped, tag = 'input window, operand 0, single buffered']
    #allocation3 [shape = 's32[2]{0}', space=sflag, size = 0x8, scoped, tag = 'scoped memory for tpu_custom_call.1']
    #allocation4 [shape = 's32[2]{0}', space=sflag, size = 0x8, scoped, tag = 'scoped memory for tpu_custom_call.1']
    #allocation5 [shape = 's32[2]{0}', space=sflag, size = 0x8, scoped, tag = 'scoped memory for tpu_custom_call.1']
    #allocation6 [shape = 'u8[32768]{0}', space=vmem, size = 0x8000, scoped, tag = 'input window, operand 1']
    #allocation7 [shape = 'u8[16384]{0}', space=vmem, size = 0x4000, scoped, tag = 'input window, operand 2, single buffered']
    #allocation8 [shape = 's32[1]{0}', space=sflag, size = 0x4, scoped, tag = 'scoped memory for tpu_custom_call.1']
    #allocation9 [shape = 'u8[32768]{0}', space=vmem, size = 0x8000, scoped, tag = 'output window, operand 0']
    %8 = vsyncpa [#allocation5], 0
    %9 = vsyncpa [#allocation3], 0
    %s10 = scalar_lea.sflag [#allocation3], 1
    %11 = vsyncpa %s10, 0
    %12 = vsyncpa [#allocation8], 0
    %13 = vsyncpa [#allocation4], 0
    %s14 = scalar_lea.sflag [#allocation4], 1
    %15 = vsyncpa %s14, 0
    loop: start=0, step=1, limit=4
    $region2: #{tpu_custom_call.1} parent=1 // loop_pre_header
      _
    $region3: #{tpu_custom_call.1} parent=1 // loop_header
      %s17 = sphi 0, %s21
      %p18 = scmp.ge.s32.totalorder %s17, 4
      %s24 = sphi 0, %s36
      %s25 = sphi 0, %s32
      %s26 = sphi 0, %s24
      %s27 = sphi 0, %s25
      %s28 = sphi 0, %s26
      %s29 = sphi 0, %s27
      %s37 = sphi 0, %s37
      %s39 = sphi 0, %s37
      %s40 = sphi 0, %s39
      %s54 = sphi 0, %s40
      %s62 = sphi 0, %s64
      %s65 = sphi 0, %s62
      %s66 = sphi 0, %s65
      %s82 = sphi 0, %s66
      %s86 = sphi 0, %s86
      %s88 = sphi 0, %s86
      %s89 = sphi 0, %s88
      %s103 = sphi 0, %s89
      %s111 = sphi 0, %s113
      %s114 = sphi 0, %s111
      %s115 = sphi 0, %s114
      %s131 = sphi 0, %s115
    $region4: #{tpu_custom_call.1} parent=1 // loop_header_branch
      %20 = sbr.rel (%p18) target = $region8
    $region5: #{tpu_custom_call.1} parent=1 // loop_body
      %s22 = ssub.s32 %s17, 1
      %s23 = ssub.s32 %s17, 2
      %s30 = sadd.s32 1, %s25
      %p31 = scmp.ge.s32.totalorder %s30, 1
      %s32 = scalar_select %p31, 0, %s30
      %s33 = sadd.s32 1, %s24
      %s34 = scalar_select %p31, %s33, %s24
      %p35 = scmp.ge.s32.totalorder %s34, 2
      %s36 = scalar_select %p35, 0, %s34
      %s38 = sadd.s32 %s37, 1
      %p41 = scmp.eq.s32.totalorder %s17, 1
      %p42 = scmp.ne.s32.totalorder %s37, %s39
      %p43 = scmp.eq.s32.totalorder %s17, 0
      %p44 = por %p42, %p43
      %p45 = scmp.ne.s32.totalorder %s37, %s39
      %p46 = scmp.eq.s32.totalorder %s22, 1
      %p47 = por %p45, %p46
      %p48 = scmp.ne.s32.totalorder %s39, %s40
      %p49 = scmp.eq.s32.totalorder %s22, 0
      %p50 = por %p48, %p49
      %p51 = scmp.ne.s32.totalorder %s39, %s40
      %p52 = scmp.eq.s32.totalorder %s23, 1
      %p53 = por %p51, %p52
      %p55 = scmp.ne.s32.totalorder %s40, %s54
      %p56 = scmp.eq.s32.totalorder %s23, 0
      %p57 = por %p55, %p56
      %s58 = ssub.s32 %s24, %s36
      %s59 = ssub.s32 %s25, %s32
      %s60 = sor.u32 %s58, %s59
      %p61 = scmp.eq.s32.totalorder %s60, 0
      %s63 = sadd.s32 %s62, 1
      %s64 = scalar_select %p61, %s62, %s63
      %p67 = pneg %p61
      %p68 = scmp.eq.s32.totalorder %s17, 1
      %p69 = por %p67, %p68
      %p70 = scmp.ne.s32.totalorder %s62, %s65
      %p71 = scmp.eq.s32.totalorder %s17, 0
      %p72 = por %p70, %p71
      %p73 = scmp.ne.s32.totalorder %s62, %s65
      %p74 = scmp.eq.s32.totalorder %s22, 1
      %p75 = por %p73, %p74
      %p76 = scmp.ne.s32.totalorder %s65, %s66
      %p77 = scmp.eq.s32.totalorder %s22, 0
      %p78 = por %p76, %p77
      %p79 = scmp.ne.s32.totalorder %s65, %s66
      %p80 = scmp.eq.s32.totalorder %s23, 1
      %p81 = por %p79, %p80
      %p83 = scmp.ne.s32.totalorder %s66, %s82
      %p84 = scmp.eq.s32.totalorder %s23, 0
      %p85 = por %p83, %p84
      %s87 = sadd.s32 %s86, 1
      %p90 = scmp.eq.s32.totalorder %s17, 1
      %p91 = scmp.ne.s32.totalorder %s86, %s88
      %p92 = scmp.eq.s32.totalorder %s17, 0
      %p93 = por %p91, %p92
      %p94 = scmp.ne.s32.totalorder %s86, %s88
      %p95 = scmp.eq.s32.totalorder %s22, 1
      %p96 = por %p94, %p95
      %p97 = scmp.ne.s32.totalorder %s88, %s89
      %p98 = scmp.eq.s32.totalorder %s22, 0
      %p99 = por %p97, %p98
      %p100 = scmp.ne.s32.totalorder %s88, %s89
      %p101 = scmp.eq.s32.totalorder %s23, 1
      %p102 = por %p100, %p101
      %p104 = scmp.ne.s32.totalorder %s89, %s103
      %p105 = scmp.eq.s32.totalorder %s23, 0
      %p106 = por %p104, %p105
      %s107 = ssub.s32 %s24, %s36
      %s108 = ssub.s32 %s25, %s32
      %s109 = sor.u32 %s107, %s108
      %p110 = scmp.eq.s32.totalorder %s109, 0
      %s112 = sadd.s32 %s111, 1
      %s113 = scalar_select %p110, %s111, %s112
      %p116 = pneg %p110
      %p117 = scmp.eq.s32.totalorder %s17, 1
      %p118 = por %p116, %p117
      %p119 = scmp.ne.s32.totalorder %s111, %s114
      %p120 = scmp.eq.s32.totalorder %s17, 0
      %p121 = por %p119, %p120
      %p122 = scmp.ne.s32.totalorder %s111, %s114
      %p123 = scmp.eq.s32.totalorder %s22, 1
      %p124 = por %p122, %p123
      %p125 = scmp.ne.s32.totalorder %s114, %s115
      %p126 = scmp.eq.s32.totalorder %s22, 0
      %p127 = por %p125, %p126
      %p128 = scmp.ne.s32.totalorder %s114, %s115
      %p129 = scmp.eq.s32.totalorder %s23, 1
      %p130 = por %p128, %p129
      %p132 = scmp.ne.s32.totalorder %s115, %s131
      %p133 = scmp.eq.s32.totalorder %s23, 0
      %p134 = por %p132, %p133
      %p135 = scmp.le.s32.totalorder 1, %s17
      %p136 = scmp.lt.s32.totalorder %s17, 3
      %p137 = pnand %p135, %p136
      %p138 = pneg %p137
      // Predicated region
      $region9: #{tpu_custom_call.1} parent=5 // pred_check
        _
      $region10: #{tpu_custom_call.1} parent=5 // pred_check_branch
        %140 = sbr.rel (%p137) target = $region12
      $region11: #{tpu_custom_call.1} parent=5 // pred_region
        %s141 = ssub.s32 %s17, 1
        // Predicated region
        $region13: #{tpu_custom_call.1} parent=11 // pred_check
          %p142 = pneg %p50
        $region14: #{tpu_custom_call.1} parent=11 // pred_check_branch
          %144 = sbr.rel (%p142) target = $region16
        $region15: #{tpu_custom_call.1} parent=11 // pred_region
          %146 = vsyncadd [#allocation5], 0
          %s148 = sshll.u32 %s0, 4
          %s149 = int_to_ptr.hbm [resolvable:$true] %s148
          %151 = dma.hbm_to_smem %s149, 16, [#allocation2], [#allocation5]
        $region16: #{tpu_custom_call.1} parent=11 // pred_fallthru
          _
        // Predicated region
        $region17: #{tpu_custom_call.1} parent=11 // pred_check
          %p152 = pneg %p99
        $region18: #{tpu_custom_call.1} parent=11 // pred_check_branch
          %154 = sbr.rel (%p152) target = $region20
        $region19: #{tpu_custom_call.1} parent=11 // pred_region
          %156 = vsyncadd [#allocation8], 0
          %s157 = sshll.u32 %s2, 4
          %s158 = int_to_ptr.hbm [resolvable:$true] %s157
          %s159 = sshll.u32 [#allocation7], 4
          %s160 = int_to_ptr.vmem [resolvable:$true] %s159
          %165 = dma.hbm_to_vmem [thread:$0]  %s158, 512, %s160, [#allocation8], 128, 128, 8
        $region20: #{tpu_custom_call.1} parent=11 // pred_fallthru
          _
      $region12: #{tpu_custom_call.1} parent=5 // pred_fallthru
        _
      %p166 = scmp.lt.s32.totalorder %s17, 2
      // Predicated region
      $region21: #{tpu_custom_call.1} parent=5 // pred_check
        %p167 = pneg %p166
      $region22: #{tpu_custom_call.1} parent=5 // pred_check_branch
        %169 = sbr.rel (%p167) target = $region24
      $region23: #{tpu_custom_call.1} parent=5 // pred_region
        // Predicated region
        $region25: #{tpu_custom_call.1} parent=23 // pred_check
          %p170 = pneg %p72
        $region26: #{tpu_custom_call.1} parent=23 // pred_check_branch
          %172 = sbr.rel (%p170) target = $region28
        $region27: #{tpu_custom_call.1} parent=23 // pred_region
          %s173 = sand.u32 %s62, 1
          %s174 = scalar_lea.sflag [#allocation3], %s173
          %s175 = sand.u32 %s62, 1
          %s176 = smul.addr %s175, 32
          %s177 = scalar_lea.vmem [#allocation6], %s176
          %s178 = smul.u32 4, %s25
          %180 = vsyncadd %s174, 0
          %s181 = smul.addr %s24, 4
          %s182 = sadd.s32 %s178, %s181
          %s183 = smul.addr %s182, 8
          %s184 = scalar_lea.hbm %s1, %s183
          %s185 = sshll.u32 %s184, 4
          %s186 = int_to_ptr.hbm [resolvable:$true] %s185
          %s187 = sshll.u32 %s177, 4
          %s188 = int_to_ptr.vmem [resolvable:$true] %s187
          %193 = dma.hbm_to_vmem [thread:$0]  %s186, 512, %s188, %s174, 128, 128, 8
        $region28: #{tpu_custom_call.1} parent=23 // pred_fallthru
          _
      $region24: #{tpu_custom_call.1} parent=5 // pred_fallthru
        _
      %p194 = scmp.le.s32.totalorder 1, %s17
      %p195 = scmp.lt.s32.totalorder %s17, 3
      %p196 = pnand %p194, %p195
      %p197 = pneg %p196
      // Predicated region
      $region29: #{tpu_custom_call.1} parent=5 // pred_check
        _
      $region30: #{tpu_custom_call.1} parent=5 // pred_check_branch
        %199 = sbr.rel (%p196) target = $region32
      $region31: #{tpu_custom_call.1} parent=5 // pred_region
        %s200 = ssub.s32 %s17, 1
        // Predicated region
        $region33: #{tpu_custom_call.1} parent=31 // pred_check
          %p201 = pneg %p50
        $region34: #{tpu_custom_call.1} parent=31 // pred_check_branch
          %203 = sbr.rel (%p201) target = $region36
        $region35: #{tpu_custom_call.1} parent=31 // pred_region
          %205 = dma.done [#allocation5], 16
        $region36: #{tpu_custom_call.1} parent=31 // pred_fallthru
          _
        %s206 = sand.u32 %s65, 1
        %s207 = scalar_lea.sflag [#allocation3], %s206
        %s208 = sand.u32 %s65, 1
        %s209 = smul.addr %s208, 32
        %s210 = scalar_lea.vmem [#allocation6], %s209
        // Predicated region
        $region37: #{tpu_custom_call.1} parent=31 // pred_check
          %p211 = pneg %p78
        $region38: #{tpu_custom_call.1} parent=31 // pred_check_branch
          %213 = sbr.rel (%p211) target = $region40
        $region39: #{tpu_custom_call.1} parent=31 // pred_region
          %215 = dma.done %s207, 512
        $region40: #{tpu_custom_call.1} parent=31 // pred_fallthru
          _
        // Predicated region
        $region41: #{tpu_custom_call.1} parent=31 // pred_check
          %p216 = pneg %p99
        $region42: #{tpu_custom_call.1} parent=31 // pred_check_branch
          %218 = sbr.rel (%p216) target = $region44
        $region43: #{tpu_custom_call.1} parent=31 // pred_region
          %220 = dma.done [#allocation8], 512
        $region44: #{tpu_custom_call.1} parent=31 // pred_fallthru
          _
        %221 = sfence
        %p222 = pneg %p50
        %p223 = pneg %p47
        %s224 = sand.u32 %s65, 1
        %s225 = scalar_lea.sflag [#allocation3], %s224
        %s226 = sand.u32 %s65, 1
        %s227 = smul.addr %s226, 32
        %s228 = scalar_lea.vmem [#allocation6], %s227
        %p229 = pneg %p78
        %p230 = pneg %p75
        %p231 = pneg %p99
        %p232 = pneg %p96
        %p233 = pneg %p127
        %p234 = pneg %p124
        %s235 = sand.u32 %s114, 1
        %s236 = scalar_lea.sflag [#allocation4], %s235
        %s237 = sand.u32 %s114, 1
        %s238 = smul.addr %s237, 32
        %s239 = scalar_lea.vmem [#allocation9], %s238
        %s240 = smul.u32 4, %s27
        %s241 = smul.u32 4, %s27
        %s242 = sld [smem:[#allocation2 + %s26]]
        %v243 = vstv %s242
        %v244 = vmul.f32 %v243, %v243
        %v245 = vadd.f32 %v244, 1.0
        %v246 = vrsqrt.pop %v245
        %v247 = vmul.f32 %v246, %v245
        %v248 = vmul.f32 %v247, %v246
        %v249 = vmul.f32 0.5, %v248
        %v250 = vsub.f32 1.5, %v249
        %v251 = vmul.f32 %v246, %v250
        %vm252 = vweird.f32 %v245
        %vm253 = vweird.f32 %v246
        %vm254 = vmor %vm252, %vm253
        %v255 = vsel %vm254, %v246, %v251
        %v256 = vld [vmem:[%s210] sm:$0xff]
        %v257 = vld [vmem:[%s210 + $0x8] sm:$0xff]
        %v258 = vld [vmem:[%s210 + $0x10] sm:$0xff]
        %v259 = vld [vmem:[%s210 + $0x18] sm:$0xff]
        %v260 = vmul.f32 %v256, %v255
        %v261 = vmul.f32 %v257, %v255
        %v262 = vmul.f32 %v258, %v255
        %v263 = vmul.f32 %v259, %v255
        %v264 = vld [vmem:[#allocation7] sm:$0xff]
        %v265 = vld [vmem:[#allocation7 + $0x8] sm:$0xff]
        %v266 = vld [vmem:[#allocation7 + $0x10] sm:$0xff]
        %v267 = vld [vmem:[#allocation7 + $0x18] sm:$0xff]
        %vm268 = vcmask 261120
        %v270 = vsel %vm268, %v260, 0
        %v273 = vsel %vm268, %v261, 0
        %v276 = vsel %vm268, %v262, 0
        %v279 = vsel %vm268, %v263, 0
        %281 = vmatpush.msra.mxu0 0.0
        %282 = vmatpush.msra.mxu0 0.0
        %283 = vmatpush.msra.mxu0 0.0
        %284 = vmatpush.msra.mxu0 0.0
        %285 = vmatpush.msra.mxu0 0.0
        %286 = vmatpush.msra.mxu0 0.0
        %287 = vmatpush.msra.mxu0 0.0
        %288 = vmatpush.msra.mxu0 0.0
        %289 = vmatpush.msra.mxu0 0.0
        %290 = vmatpush.msra.mxu0 0.0
        %291 = vmatpush.msra.mxu0 0.0
        %292 = vmatpush.msra.mxu0 0.0
        %293 = vmatpush.msra.mxu0 %v267
        %294 = vmatpush.msra.mxu0 %v266
        %295 = vmatpush.msra.mxu0 %v265
        %296 = vmatpush.msra.mxu0 %v264
        %297 = vmatmul.f32.gmra.mxu0 %v270
        %v298 = vpop.f32.mrf.mxu0
        %v299 = vadd.f32 0.0, %v298
        %300 = vmatmul.f32.gmra.mxu0 %v273
        %v301 = vpop.f32.mrf.mxu0
        %v302 = vadd.f32 0.0, %v301
        %303 = vmatmul.f32.gmra.mxu0 %v276
        %v304 = vpop.f32.mrf.mxu0
        %v305 = vadd.f32 0.0, %v304
        %306 = vmatmul.f32.gmra.mxu0 %v279
        %v307 = vpop.f32.mrf.mxu0
        %v308 = vadd.f32 0.0, %v307
        %309 = vdwg.mxu0
        %310 = vst [vmem:[%s239] sm:$0xff] %v299
        %311 = vst [vmem:[%s239 + $0x8] sm:$0xff] %v302
        %312 = vst [vmem:[%s239 + $0x10] sm:$0xff] %v305
        %313 = vst [vmem:[%s239 + $0x18] sm:$0xff] %v308
        %s314 = sand.u32 %s114, 1
        %s315 = scalar_lea.sflag [#allocation4], %s314
        %s316 = sand.u32 %s114, 1
        %s317 = smul.addr %s316, 32
        %s318 = scalar_lea.vmem [#allocation9], %s317
        // Predicated region
        $region45: #{tpu_custom_call.1} parent=31 // pred_check
          %p319 = pneg %p124
        $region46: #{tpu_custom_call.1} parent=31 // pred_check_branch
          %321 = sbr.rel (%p319) target = $region48
        $region47: #{tpu_custom_call.1} parent=31 // pred_region
          %s322 = smul.u32 4, %s27
          %324 = vsyncadd %s315, 0
          %s325 = smul.addr %s26, 4
          %s326 = sadd.s32 %s322, %s325
          %s327 = smul.addr %s326, 8
          %s328 = scalar_lea.hbm %s3, %s327
          %s329 = sshll.u32 %s318, 4
          %s330 = int_to_ptr.vmem [resolvable:$true] %s329
          %s331 = sshll.u32 %s328, 4
          %s332 = int_to_ptr.hbm [resolvable:$true] %s331
          %337 = dma.vmem_to_hbm [thread:$0]  %s330, 512, %s332, %s315, 128, 128, 8
        $region48: #{tpu_custom_call.1} parent=31 // pred_fallthru
          _
      $region32: #{tpu_custom_call.1} parent=5 // pred_fallthru
        _
      %p338 = scmp.le.s32.totalorder 2, %s17
      // Predicated region
      $region49: #{tpu_custom_call.1} parent=5 // pred_check
        %p339 = pneg %p338
      $region50: #{tpu_custom_call.1} parent=5 // pred_check_branch
        %341 = sbr.rel (%p339) target = $region52
      $region51: #{tpu_custom_call.1} parent=5 // pred_region
        %s342 = ssub.s32 %s17, 2
        // Predicated region
        $region53: #{tpu_custom_call.1} parent=51 // pred_check
          %p343 = pneg %p130
        $region54: #{tpu_custom_call.1} parent=51 // pred_check_branch
          %345 = sbr.rel (%p343) target = $region56
        $region55: #{tpu_custom_call.1} parent=51 // pred_region
          %s346 = sand.u32 %s115, 1
          %s347 = scalar_lea.sflag [#allocation4], %s346
          %s348 = sand.u32 %s115, 1
          %s349 = smul.addr %s348, 32
          %s350 = scalar_lea.vmem [#allocation9], %s349
          %352 = dma.done %s347, 512
        $region56: #{tpu_custom_call.1} parent=51 // pred_fallthru
          _
      $region52: #{tpu_custom_call.1} parent=5 // pred_fallthru
        _
    $region6: #{tpu_custom_call.1} parent=1 // loop_footer
      %s21 = sadd.s32 1, %s17
    $region7: #{tpu_custom_call.1} parent=1 // loop_footer_branch
      %16 = sbr.rel target = $region3
    $region8: #{tpu_custom_call.1} parent=1 // loop_exit
      _
    %353 = vsyncpa [#allocation3], 1
    %s354 = scalar_lea.sflag [#allocation3], 1
    %355 = vsyncpa %s354, 1
    %356 = vsyncpa [#allocation8], 1
    %357 = vsyncpa [#allocation4], 1
    %s358 = scalar_lea.sflag [#allocation4], 1
    %359 = vsyncpa %s358, 1
    %360 = vsyncpa [#allocation5], 1
    %s361 = scalar_lea.sflag [#allocation5], 1
    %362 = vsyncpa %s361, 1

</llo_original>
